<compile_context>
chip_gen: v5e
topology: v5e:2x2
jax: 0.10.0
libtpu: 0.0.40
codegen_flags: <defaults>
</compile_context>

<pallas_src>
import jax
import jax.numpy as jnp
from jax.experimental import pallas as pl
from jax.experimental.pallas import tpu as pltpu

# ----------------------------- model config ---------------------------------
PCD_FEAT_DIM = 32
Z_FEAT_DIM = 64
HIDDEN_DIM = 128
NUM_STEPS = 30
WPT_DIM = 6
OUT_DIM = NUM_STEPS * WPT_DIM  # 180
NEG_SLOPE = 0.01  # PyTorch nn.LeakyReLU default


def _leaky_relu(x):
    return jnp.where(x > 0, x, NEG_SLOPE * x)


def _round_up(x, m):
    return ((x + m - 1) // m) * m


def _default_tile_b():
    """Batch tile: bigger on 128 MiB-VMEM chips (v5e/v6e), halved on v7x (64 MiB)."""
    try:
        info = pltpu.get_tpu_info()
        vmem = getattr(info, "vmem_capacity_bytes", None)
        if vmem is not None and vmem >= (100 << 20):
            return 2048
    except Exception:
        pass
    return 1024


# ------------------------------- kernel -------------------------------------
def all_decoder_kernel(pn_ref, z_ref,
                       w1a_ref, w1b_ref, b1_ref,
                       w2_ref, b2_ref,
                       w3_ref, b3_ref,
                       out_ref):
    # Layer 1: concat([pn, z]) @ W1 + b1  ==  pn @ W1[:pcd] + z @ W1[pcd:] + b1.
    # Cast operands to bf16 at the MXU boundary; accumulate / bias / act in f32.
    pn = pn_ref[...].astype(jnp.bfloat16)
    z = z_ref[...].astype(jnp.bfloat16)
    h = (jnp.dot(pn, w1a_ref[...], preferred_element_type=jnp.float32)
         + jnp.dot(z, w1b_ref[...], preferred_element_type=jnp.float32)
         + b1_ref[...])
    h = _leaky_relu(h)

    # Layer 2 + LeakyReLU.
    h = jnp.dot(h.astype(jnp.bfloat16), w2_ref[...],
                preferred_element_type=jnp.float32) + b2_ref[...]
    h = _leaky_relu(h)

    # Output layer (f32 result, matches PyTorch).
    out = jnp.dot(h.astype(jnp.bfloat16), w3_ref[...],
                  preferred_element_type=jnp.float32) + b3_ref[...]
    out_ref[...] = out.astype(out_ref.dtype)


# ------------------------------- wrapper -------------------------------------
def all_decoder_forward(pn_feat, z_all, params, tile_b=None):
    """pn_feat: (B, PCD_FEAT_DIM), z_all: (B, Z_FEAT_DIM) -> (B, NUM_STEPS, 6)."""
    B = z_all.shape[0]
    w1, b1, w2, b2, w3, b3 = params

    # Split W1 rows so the concat fuses into two in-kernel matmuls (no HBM concat).
    w1a = w1[:PCD_FEAT_DIM, :].astype(jnp.bfloat16)
    w1b = w1[PCD_FEAT_DIM:, :].astype(jnp.bfloat16)
    w2b = w2.astype(jnp.bfloat16)
    w3b = w3.astype(jnp.bfloat16)
    # Biases as (1, out) so they stay 2-D in VMEM and broadcast over batch rows.
    b1_2d = b1.reshape(1, -1).astype(jnp.float32)
    b2_2d = b2.reshape(1, -1).astype(jnp.float32)
    b3_2d = b3.reshape(1, -1).astype(jnp.float32)

    if tile_b is None:
        tile_b = _default_tile_b()
    # Tile must be a multiple of 8 (sublane) and no larger than the padded batch.
    tile_b = int(max(8, min(int(tile_b), _round_up(B, 8))))
    b_pad = _round_up(B, tile_b)
    if b_pad != B:
        pad = b_pad - B
        pn_feat = jnp.pad(pn_feat, ((0, pad), (0, 0)))
        z_all = jnp.pad(z_all, ((0, pad), (0, 0)))
    n_tiles = b_pad // tile_b

    row_tile = lambda i: (i, 0)   # batch-tiled operands
    resident = lambda i: (0, 0)   # weights/biases: same block every step -> no re-DMA

    # Advisory cost hint for XLA's scheduler around the custom call.
    flops = 2 * b_pad * (PCD_FEAT_DIM * HIDDEN_DIM
                         + Z_FEAT_DIM * HIDDEN_DIM
                         + HIDDEN_DIM * HIDDEN_DIM
                         + HIDDEN_DIM * OUT_DIM)
    bytes_accessed = (b_pad * (PCD_FEAT_DIM + Z_FEAT_DIM) * 4
                      + b_pad * OUT_DIM * 4
                      + 2 * (PCD_FEAT_DIM + Z_FEAT_DIM + HIDDEN_DIM) * HIDDEN_DIM
                      + 2 * HIDDEN_DIM * OUT_DIM)

    flat = pl.pallas_call(
        all_decoder_kernel,
        out_shape=jax.ShapeDtypeStruct((b_pad, OUT_DIM), jnp.float32),
        grid=(n_tiles,),
        in_specs=[
            pl.BlockSpec((tile_b, PCD_FEAT_DIM), row_tile),
            pl.BlockSpec((tile_b, Z_FEAT_DIM), row_tile),
            pl.BlockSpec((PCD_FEAT_DIM, HIDDEN_DIM), resident),
            pl.BlockSpec((Z_FEAT_DIM, HIDDEN_DIM), resident),
            pl.BlockSpec((1, HIDDEN_DIM), resident),
            pl.BlockSpec((HIDDEN_DIM, HIDDEN_DIM), resident),
            pl.BlockSpec((1, HIDDEN_DIM), resident),
            pl.BlockSpec((HIDDEN_DIM, OUT_DIM), resident),
            pl.BlockSpec((1, OUT_DIM), resident),
        ],
        out_specs=pl.BlockSpec((tile_b, OUT_DIM), row_tile),
        compiler_params=pltpu.CompilerParams(
            dimension_semantics=("parallel",)),  # v7x: shard batch tiles over 2 TCs
        cost_estimate=pl.CostEstimate(flops=flops, transcendentals=0,
                                      bytes_accessed=bytes_accessed),
    )(pn_feat, z_all, w1a, w1b, b1_2d, w2b, b2_2d, w3b, b3_2d)

    flat = flat[:B]
    # Matches PyTorch `x.view(batch_size, self.num_steps, 6)` (hard-coded 6).
    return flat.reshape(B, NUM_STEPS, 6)


# --------------------------- reference (plain JAX) ---------------------------
def all_decoder_reference(pn_feat, z_all, params):
    """bf16-at-the-dot reference matching the kernel's numerics."""
    w1, b1, w2, b2, w3, b3 = params
    x = jnp.concatenate([pn_feat, z_all], axis=-1)
    h = _leaky_relu(jnp.dot(x.astype(jnp.bfloat16), w1.astype(jnp.bfloat16),
                            preferred_element_type=jnp.float32) + b1)
    h = _leaky_relu(jnp.dot(h.astype(jnp.bfloat16), w2.astype(jnp.bfloat16),
                            preferred_element_type=jnp.float32) + b2)
    o = jnp.dot(h.astype(jnp.bfloat16), w3.astype(jnp.bfloat16),
                preferred_element_type=jnp.float32) + b3
    return o.reshape(z_all.shape[0], NUM_STEPS, 6)


# ------------------------- deterministic param init --------------------------
def init_params(key):
    ks = jax.random.split(key, 6)
    in1 = PCD_FEAT_DIM + Z_FEAT_DIM

    def uniform(k, shape, fan_in):
        bound = 1.0 / jnp.sqrt(jnp.float32(fan_in))
        return jax.random.uniform(k, shape, jnp.float32, -bound, bound)

    w1 = uniform(ks[0], (in1, HIDDEN_DIM), in1)
    b1 = uniform(ks[1], (HIDDEN_DIM,), in1)
    w2 = uniform(ks[2], (HIDDEN_DIM, HIDDEN_DIM), HIDDEN_DIM)
    b2 = uniform(ks[3], (HIDDEN_DIM,), HIDDEN_DIM)
    w3 = uniform(ks[4], (HIDDEN_DIM, OUT_DIM), HIDDEN_DIM)
    b3 = uniform(ks[5], (OUT_DIM,), HIDDEN_DIM)
    return (w1, b1, w2, b2, w3, b3)


if __name__ == "__main__":
    key = jax.random.PRNGKey(0)
    k_pn, k_z, k_p = jax.random.split(key, 3)
    params = init_params(k_p)

    # Small single-tile case (tile clamps to the batch size).
    B = 64
    pn_feat = jax.random.normal(k_pn, (B, PCD_FEAT_DIM), jnp.float32)
    z_all = jax.random.normal(k_z, (B, Z_FEAT_DIM), jnp.float32)
    out = jax.block_until_ready(all_decoder_forward(pn_feat, z_all, params))
    ref = all_decoder_reference(pn_feat, z_all, params)
    assert out.shape == (B, NUM_STEPS, 6), out.shape
    assert jnp.allclose(out, ref, atol=1e-2, rtol=1e-2), "mismatch vs reference (B=64)"

    # Multi-tile grid + batch-padding path (B=300 with 128-row tiles -> 3 grid steps).
    B2 = 300
    pn2 = jax.random.normal(jax.random.PRNGKey(1), (B2, PCD_FEAT_DIM), jnp.float32)
    z2 = jax.random.normal(jax.random.PRNGKey(2), (B2, Z_FEAT_DIM), jnp.float32)
    out2 = jax.block_until_ready(all_decoder_forward(pn2, z2, params, tile_b=128))
    ref2 = all_decoder_reference(pn2, z2, params)
    assert out2.shape == (B2, NUM_STEPS, 6), out2.shape
    assert jnp.allclose(out2, ref2, atol=1e-2, rtol=1e-2), "mismatch vs reference (B=300)"

    print("KERNEL_OK")
</pallas_src>

<mosaic_0001>
module attributes {stable_mosaic.version = 11 : i64} {
  func.func @all_decoder_kernel(%arg0: i32, %arg1: memref<64x32xf32, #tpu.memory_space<vmem>>, %arg2: memref<64x64xf32, #tpu.memory_space<vmem>>, %arg3: memref<32x128xbf16, #tpu.memory_space<vmem>>, %arg4: memref<64x128xbf16, #tpu.memory_space<vmem>>, %arg5: memref<1x128xf32, #tpu.memory_space<vmem>>, %arg6: memref<128x128xbf16, #tpu.memory_space<vmem>>, %arg7: memref<1x128xf32, #tpu.memory_space<vmem>>, %arg8: memref<128x180xbf16, #tpu.memory_space<vmem>>, %arg9: memref<1x180xf32, #tpu.memory_space<vmem>>, %arg10: memref<64x180xf32, #tpu.memory_space<vmem>>) attributes {dimension_semantics = [#tpu.dimension_semantics<parallel>], iteration_bounds = array<i64: 1>, scalar_prefetch = 0 : i64, scratch_operands = 0 : i64, tpu.core_type = #tpu.core_type<tc>, window_params = [{transform_indices = @transform_0, window_bounds = array<i64: 64, 32>}, {transform_indices = @transform_1, window_bounds = array<i64: 64, 64>}, {pipeline_mode = #tpu.pipeline_mode<synchronous>, transform_indices = @transform_2, window_bounds = array<i64: 32, 128>}, {pipeline_mode = #tpu.pipeline_mode<synchronous>, transform_indices = @transform_3, window_bounds = array<i64: 64, 128>}, {pipeline_mode = #tpu.pipeline_mode<synchronous>, transform_indices = @transform_4, window_bounds = array<i64: 1, 128>}, {pipeline_mode = #tpu.pipeline_mode<synchronous>, transform_indices = @transform_5, window_bounds = array<i64: 128, 128>}, {pipeline_mode = #tpu.pipeline_mode<synchronous>, transform_indices = @transform_6, window_bounds = array<i64: 1, 128>}, {pipeline_mode = #tpu.pipeline_mode<synchronous>, transform_indices = @transform_7, window_bounds = array<i64: 128, 180>}, {pipeline_mode = #tpu.pipeline_mode<synchronous>, transform_indices = @transform_8, window_bounds = array<i64: 1, 180>}, {transform_indices = @transform_9, window_bounds = array<i64: 64, 180>}]} {
    %c0 = arith.constant 0 : index
    %c0_0 = arith.constant 0 : index
    %0 = vector.load %arg1[%c0, %c0_0] : memref<64x32xf32, #tpu.memory_space<vmem>>, vector<64x32xf32>
    %1 = arith.truncf %0 : vector<64x32xf32> to vector<64x32xbf16>
    %c0_1 = arith.constant 0 : index
    %c0_2 = arith.constant 0 : index
    %2 = vector.load %arg2[%c0_1, %c0_2] : memref<64x64xf32, #tpu.memory_space<vmem>>, vector<64x64xf32>
    %3 = arith.truncf %2 : vector<64x64xf32> to vector<64x64xbf16>
    %c0_3 = arith.constant 0 : index
    %c0_4 = arith.constant 0 : index
    %4 = vector.load %arg3[%c0_3, %c0_4] : memref<32x128xbf16, #tpu.memory_space<vmem>>, vector<32x128xbf16>
    %cst = arith.constant dense<0.000000e+00> : vector<64x128xf32>
    %5 = tpu.matmul %1, %4, %cst {dimension_numbers = #tpu.dot_dimension_numbers<[1], [0], [0], [1], [0, 0, 1, 1], [], []>} : vector<64x32xbf16>, vector<32x128xbf16>, vector<64x128xf32> -> vector<64x128xf32>
    %c0_5 = arith.constant 0 : index
    %c0_6 = arith.constant 0 : index
    %6 = vector.load %arg4[%c0_5, %c0_6] : memref<64x128xbf16, #tpu.memory_space<vmem>>, vector<64x128xbf16>
    %cst_7 = arith.constant dense<0.000000e+00> : vector<64x128xf32>
    %7 = tpu.matmul %3, %6, %cst_7 {dimension_numbers = #tpu.dot_dimension_numbers<[1], [0], [0], [1], [0, 0, 1, 1], [], []>} : vector<64x64xbf16>, vector<64x128xbf16>, vector<64x128xf32> -> vector<64x128xf32>
    %8 = arith.addf %5, %7 : vector<64x128xf32>
    %c0_8 = arith.constant 0 : index
    %c0_9 = arith.constant 0 : index
    %9 = vector.load %arg5[%c0_8, %c0_9] : memref<1x128xf32, #tpu.memory_space<vmem>>, vector<1x128xf32>
    %10 = vector.broadcast %9 : vector<1x128xf32> to vector<64x128xf32>
    %11 = arith.addf %8, %10 : vector<64x128xf32>
    %cst_10 = arith.constant 0.000000e+00 : f32
    %12 = vector.broadcast %cst_10 : f32 to vector<64x128xf32>
    %13 = arith.cmpf ogt, %11, %12 : vector<64x128xf32>
    %cst_11 = arith.constant 0.00999999977 : f32
    %14 = vector.broadcast %cst_11 : f32 to vector<64x128xf32>
    %15 = arith.mulf %14, %11 : vector<64x128xf32>
    %16 = arith.select %13, %11, %15 : vector<64x128xi1>, vector<64x128xf32>
    %17 = arith.truncf %16 : vector<64x128xf32> to vector<64x128xbf16>
    %c0_12 = arith.constant 0 : index
    %c0_13 = arith.constant 0 : index
    %18 = vector.load %arg6[%c0_12, %c0_13] : memref<128x128xbf16, #tpu.memory_space<vmem>>, vector<128x128xbf16>
    %cst_14 = arith.constant dense<0.000000e+00> : vector<64x128xf32>
    %19 = tpu.matmul %17, %18, %cst_14 {dimension_numbers = #tpu.dot_dimension_numbers<[1], [0], [0], [1], [0, 0, 1, 1], [], []>} : vector<64x128xbf16>, vector<128x128xbf16>, vector<64x128xf32> -> vector<64x128xf32>
    %c0_15 = arith.constant 0 : index
    %c0_16 = arith.constant 0 : index
    %20 = vector.load %arg7[%c0_15, %c0_16] : memref<1x128xf32, #tpu.memory_space<vmem>>, vector<1x128xf32>
    %21 = vector.broadcast %20 : vector<1x128xf32> to vector<64x128xf32>
    %22 = arith.addf %19, %21 : vector<64x128xf32>
    %cst_17 = arith.constant 0.000000e+00 : f32
    %23 = vector.broadcast %cst_17 : f32 to vector<64x128xf32>
    %24 = arith.cmpf ogt, %22, %23 : vector<64x128xf32>
    %cst_18 = arith.constant 0.00999999977 : f32
    %25 = vector.broadcast %cst_18 : f32 to vector<64x128xf32>
    %26 = arith.mulf %25, %22 : vector<64x128xf32>
    %27 = arith.select %24, %22, %26 : vector<64x128xi1>, vector<64x128xf32>
    %28 = arith.truncf %27 : vector<64x128xf32> to vector<64x128xbf16>
    %c0_19 = arith.constant 0 : index
    %c0_20 = arith.constant 0 : index
    %29 = vector.load %arg8[%c0_19, %c0_20] : memref<128x180xbf16, #tpu.memory_space<vmem>>, vector<128x180xbf16>
    %cst_21 = arith.constant dense<0.000000e+00> : vector<64x180xf32>
    %30 = tpu.matmul %28, %29, %cst_21 {dimension_numbers = #tpu.dot_dimension_numbers<[1], [0], [0], [1], [0, 0, 1, 1], [], []>} : vector<64x128xbf16>, vector<128x180xbf16>, vector<64x180xf32> -> vector<64x180xf32>
    %c0_22 = arith.constant 0 : index
    %c0_23 = arith.constant 0 : index
    %31 = vector.load %arg9[%c0_22, %c0_23] : memref<1x180xf32, #tpu.memory_space<vmem>>, vector<1x180xf32>
    %32 = vector.broadcast %31 : vector<1x180xf32> to vector<64x180xf32>
    %33 = arith.addf %30, %32 : vector<64x180xf32>
    %c0_24 = arith.constant 0 : index
    %c0_25 = arith.constant 0 : index
    %34 = vector.load %arg10[%c0_24, %c0_25] : memref<64x180xf32, #tpu.memory_space<vmem>>, vector<64x180xf32>
    tpu.vector_store %arg10[%c0_24, %c0_25], %33 {strides = array<i32>} : memref<64x180xf32, #tpu.memory_space<vmem>>, vector<64x180xf32>,
    return
  }
  func.func @transform_0(%arg0: i32) -> (i32, i32) {
    %c0_i32 = arith.constant 0 : i32
    %c0_i32_0 = arith.constant 0 : i32
    return %arg0, %c0_i32 : i32, i32
  }
  func.func @transform_1(%arg0: i32) -> (i32, i32) {
    %c0_i32 = arith.constant 0 : i32
    %c0_i32_0 = arith.constant 0 : i32
    return %arg0, %c0_i32 : i32, i32
  }
  func.func @transform_2(%arg0: i32) -> (i32, i32) {
    %c0_i32 = arith.constant 0 : i32
    %c0_i32_0 = arith.constant 0 : i32
    %c0_i32_1 = arith.constant 0 : i32
    return %c0_i32, %c0_i32_0 : i32, i32
  }
  func.func @transform_3(%arg0: i32) -> (i32, i32) {
    %c0_i32 = arith.constant 0 : i32
    %c0_i32_0 = arith.constant 0 : i32
    %c0_i32_1 = arith.constant 0 : i32
    return %c0_i32, %c0_i32_0 : i32, i32
  }
  func.func @transform_4(%arg0: i32) -> (i32, i32) {
    %c0_i32 = arith.constant 0 : i32
    %c0_i32_0 = arith.constant 0 : i32
    %c0_i32_1 = arith.constant 0 : i32
    return %c0_i32, %c0_i32_0 : i32, i32
  }
  func.func @transform_5(%arg0: i32) -> (i32, i32) {
    %c0_i32 = arith.constant 0 : i32
    %c0_i32_0 = arith.constant 0 : i32
    %c0_i32_1 = arith.constant 0 : i32
    return %c0_i32, %c0_i32_0 : i32, i32
  }
  func.func @transform_6(%arg0: i32) -> (i32, i32) {
    %c0_i32 = arith.constant 0 : i32
    %c0_i32_0 = arith.constant 0 : i32
    %c0_i32_1 = arith.constant 0 : i32
    return %c0_i32, %c0_i32_0 : i32, i32
  }
  func.func @transform_7(%arg0: i32) -> (i32, i32) {
    %c0_i32 = arith.constant 0 : i32
    %c0_i32_0 = arith.constant 0 : i32
    %c0_i32_1 = arith.constant 0 : i32
    return %c0_i32, %c0_i32_0 : i32, i32
  }
  func.func @transform_8(%arg0: i32) -> (i32, i32) {
    %c0_i32 = arith.constant 0 : i32
    %c0_i32_0 = arith.constant 0 : i32
    %c0_i32_1 = arith.constant 0 : i32
    return %c0_i32, %c0_i32_0 : i32, i32
  }
  func.func @transform_9(%arg0: i32) -> (i32, i32) {
    %c0_i32 = arith.constant 0 : i32
    %c0_i32_0 = arith.constant 0 : i32
    return %arg0, %c0_i32 : i32, i32
  }
}

</mosaic_0001>

<llo_original>
// kernel: tpu_custom_call.1
$region0: #{tpu_custom_call.1}
  #allocation0 [shape = 'u32[]', space=smem, size = 0x4, offset = 0x4, fixed_abs, tag = 'smem constant byte address 0x4 - core index']
  #allocation1 [shape = 'u32[72,128]{1,0:T(1,128)}', space=vmem, size = 0x9000, scoped, tag = 'internal scratch']
  %s0 = inlined_call_operand.vmem [shape: f32[64,32], index: 0, kind: input, shape index: {}]
  %s1 = inlined_call_operand.vmem [shape: f32[64,64], index: 1, kind: input, shape index: {}]
  %s2 = inlined_call_operand.vmem [shape: bf16[32,128], index: 2, kind: input, shape index: {}]
  %s3 = inlined_call_operand.vmem [shape: bf16[64,128], index: 3, kind: input, shape index: {}]
  %s4 = inlined_call_operand.vmem [shape: f32[1,128], index: 4, kind: input, shape index: {}]
  %s5 = inlined_call_operand.vmem [shape: bf16[128,128], index: 5, kind: input, shape index: {}]
  %s6 = inlined_call_operand.vmem [shape: f32[1,128], index: 6, kind: input, shape index: {}]
  %s7 = inlined_call_operand.vmem [shape: bf16[128,180], index: 7, kind: input, shape index: {}]
  %s8 = inlined_call_operand.vmem [shape: f32[1,180], index: 8, kind: input, shape index: {}]
  %s9 = inlined_call_operand.hbm [shape: f32[64,180], index: 9, kind: output, shape index: {}]
  %s10 = sld [smem:[#allocation0]]
  $region46: #{tpu_custom_call.1} parent=0
    _
  %s12 = ssub.s32 1, %s10
  %s13 = scalar_select 0, %s12, %s10
  $region1: #{tpu_custom_call.1} parent=0
    #allocation2 [shape = 'u8[65536]{0}', space=vmem, size = 0x10000, scoped, tag = 'output window, operand 0, single buffered']
    #allocation3 [shape = 's32[1]{0}', space=sflag, size = 0x4, scoped, tag = 'scoped memory for tpu_custom_call.1']
    %14 = vsyncpa [#allocation3], 0
    // Predicated region
    $region2: #{tpu_custom_call.1} parent=1 // pred_check
      _
    $region3: #{tpu_custom_call.1} parent=1 // pred_check_branch
      %16 = sbr.rel (0) target = $region5
    $region4: #{tpu_custom_call.1} parent=1 // pred_region
      _
    $region5: #{tpu_custom_call.1} parent=1 // pred_fallthru
      _
    // Predicated region
    $region6: #{tpu_custom_call.1} parent=1 // pred_check
      _
    $region7: #{tpu_custom_call.1} parent=1 // pred_check_branch
      %18 = sbr.rel (0) target = $region9
    $region8: #{tpu_custom_call.1} parent=1 // pred_region
      _
    $region9: #{tpu_custom_call.1} parent=1 // pred_fallthru
      _
    // Predicated region
    $region10: #{tpu_custom_call.1} parent=1 // pred_check
      _
    $region11: #{tpu_custom_call.1} parent=1 // pred_check_branch
      %20 = sbr.rel (0) target = $region13
    $region12: #{tpu_custom_call.1} parent=1 // pred_region
      _
    $region13: #{tpu_custom_call.1} parent=1 // pred_fallthru
      _
    // Predicated region
    $region14: #{tpu_custom_call.1} parent=1 // pred_check
      _
    $region15: #{tpu_custom_call.1} parent=1 // pred_check_branch
      %22 = sbr.rel (0) target = $region17
    $region16: #{tpu_custom_call.1} parent=1 // pred_region
      _
    $region17: #{tpu_custom_call.1} parent=1 // pred_fallthru
      _
    // Predicated region
    $region18: #{tpu_custom_call.1} parent=1 // pred_check
      _
    $region19: #{tpu_custom_call.1} parent=1 // pred_check_branch
      %24 = sbr.rel (0) target = $region21
    $region20: #{tpu_custom_call.1} parent=1 // pred_region
      _
    $region21: #{tpu_custom_call.1} parent=1 // pred_fallthru
      _
    // Predicated region
    $region22: #{tpu_custom_call.1} parent=1 // pred_check
      _
    $region23: #{tpu_custom_call.1} parent=1 // pred_check_branch
      %26 = sbr.rel (0) target = $region25
    $region24: #{tpu_custom_call.1} parent=1 // pred_region
      _
    $region25: #{tpu_custom_call.1} parent=1 // pred_fallthru
      _
    // Predicated region
    $region26: #{tpu_custom_call.1} parent=1 // pred_check
      _
    $region27: #{tpu_custom_call.1} parent=1 // pred_check_branch
      %28 = sbr.rel (0) target = $region29
    $region28: #{tpu_custom_call.1} parent=1 // pred_region
      _
    $region29: #{tpu_custom_call.1} parent=1 // pred_fallthru
      _
    // Predicated region
    $region30: #{tpu_custom_call.1} parent=1 // pred_check
      _
    $region31: #{tpu_custom_call.1} parent=1 // pred_check_branch
      %30 = sbr.rel (0) target = $region33
    $region32: #{tpu_custom_call.1} parent=1 // pred_region
      _
    $region33: #{tpu_custom_call.1} parent=1 // pred_fallthru
      _
    // Predicated region
    $region34: #{tpu_custom_call.1} parent=1 // pred_check
      _
    $region35: #{tpu_custom_call.1} parent=1 // pred_check_branch
      %32 = sbr.rel (0) target = $region37
    $region36: #{tpu_custom_call.1} parent=1 // pred_region
      _
    $region37: #{tpu_custom_call.1} parent=1 // pred_fallthru
      _
    %v34 = vld [vmem:[%s0] sm:$0xff]
    %v35 = vld [vmem:[%s0 + $0x8] sm:$0xff]
    %v36 = vld [vmem:[%s0 + $0x10] sm:$0xff]
    %v37 = vld [vmem:[%s0 + $0x18] sm:$0xff]
    %v38 = vld [vmem:[%s0 + $0x20] sm:$0xff]
    %v39 = vld [vmem:[%s0 + $0x28] sm:$0xff]
    %v40 = vld [vmem:[%s0 + $0x30] sm:$0xff]
    %v41 = vld [vmem:[%s0 + $0x38] sm:$0xff]
    %v42 = vpack.c.bf16 %v35, %v34
    %v43 = vpack.c.bf16 %v37, %v36
    %v44 = vpack.c.bf16 %v39, %v38
    %v45 = vpack.c.bf16 %v41, %v40
    %v46 = vld [vmem:[%s1] sm:$0xff]
    %v47 = vld [vmem:[%s1 + $0x8] sm:$0xff]
    %v48 = vld [vmem:[%s1 + $0x10] sm:$0xff]
    %v49 = vld [vmem:[%s1 + $0x18] sm:$0xff]
    %v50 = vld [vmem:[%s1 + $0x20] sm:$0xff]
    %v51 = vld [vmem:[%s1 + $0x28] sm:$0xff]
    %v52 = vld [vmem:[%s1 + $0x30] sm:$0xff]
    %v53 = vld [vmem:[%s1 + $0x38] sm:$0xff]
    %v54 = vpack.c.bf16 %v47, %v46
    %v55 = vpack.c.bf16 %v49, %v48
    %v56 = vpack.c.bf16 %v51, %v50
    %v57 = vpack.c.bf16 %v53, %v52
    %v58 = vld [vmem:[%s2] sm:$0xf]
    %v59 = vld [vmem:[%s2 + $0x4] sm:$0xf]
    %v60 = vld [vmem:[%s2 + $0x8] sm:$0xf]
    %v61 = vld [vmem:[%s2 + $0xc] sm:$0xf]
    %v62 = vld [vmem:[%s3] sm:$0xf]
    %v63 = vld [vmem:[%s3 + $0x4] sm:$0xf]
    %v64 = vld [vmem:[%s3 + $0x8] sm:$0xf]
    %v65 = vld [vmem:[%s3 + $0xc] sm:$0xf]
    %v66 = vld [vmem:[%s3 + $0x10] sm:$0xf]
    %v67 = vld [vmem:[%s3 + $0x14] sm:$0xf]
    %v68 = vld [vmem:[%s3 + $0x18] sm:$0xf]
    %v69 = vld [vmem:[%s3 + $0x1c] sm:$0xf]
    %v78 = vunpack.c.l.b16 %v62
    %v79 = vunpack.c.l.b16 %v63
    %v80 = vunpack.c.l.b16 %v64
    %v81 = vunpack.c.l.b16 %v65
    %v82 = vunpack.c.l.b16 %v66
    %v83 = vunpack.c.l.b16 %v67
    %v84 = vunpack.c.l.b16 %v68
    %v85 = vunpack.c.l.b16 %v69
    %v86 = vpack.c.b16 %v79, %v78
    %v87 = vpack.c.b16 %v81, %v80
    %v88 = vpack.c.b16 %v83, %v82
    %v89 = vpack.c.b16 %v85, %v84
    %vm94 = vcmask 523264
    %v96 = vsel %vm94, %v54, 0
    %v99 = vsel %vm94, %v55, 0
    %v102 = vsel %vm94, %v56, 0
    %v105 = vsel %vm94, %v57, 0
    %107 = vmatpush.bf16.msra.mxu0 0
    %108 = vmatpush.bf16.msra.mxu0 0
    %109 = vmatpush.bf16.msra.mxu0 0
    %110 = vmatpush.bf16.msra.mxu0 0
    %111 = vmatpush.bf16.msra.mxu0 %v89
    %112 = vmatpush.bf16.msra.mxu0 %v88
    %113 = vmatpush.bf16.msra.mxu0 %v87
    %114 = vmatpush.bf16.msra.mxu0 %v86
    %115 = vmatmul.bf16.gmra.mxu0 %v96
    %v116 = vpop.f32.mrf.mxu0
    %v117 = vadd.f32 0.0, %v116
    %v118 = vpop.f32.mrf.mxu0
    %v119 = vadd.f32 0.0, %v118
    %120 = vmatmul.bf16.gmra.mxu0 %v99
    %v121 = vpop.f32.mrf.mxu0
    %v122 = vadd.f32 0.0, %v121
    %v123 = vpop.f32.mrf.mxu0
    %v124 = vadd.f32 0.0, %v123
    %125 = vmatmul.bf16.gmra.mxu0 %v102
    %v126 = vpop.f32.mrf.mxu0
    %v127 = vadd.f32 0.0, %v126
    %v128 = vpop.f32.mrf.mxu0
    %v129 = vadd.f32 0.0, %v128
    %130 = vmatmul.bf16.gmra.mxu0 %v105
    %v131 = vpop.f32.mrf.mxu0
    %v132 = vadd.f32 0.0, %v131
    %v133 = vpop.f32.mrf.mxu0
    %v134 = vadd.f32 0.0, %v133
    %135 = vdwg.mxu0
    %v140 = vunpack.c.l.b16 %v58
    %v141 = vunpack.c.l.b16 %v59
    %v142 = vunpack.c.l.b16 %v60
    %v143 = vunpack.c.l.b16 %v61
    %v144 = vpack.c.b16 %v141, %v140
    %v145 = vpack.c.b16 %v143, %v142
    %vm148 = vcmask 261120
    %v150 = vsel %vm148, %v42, 0
    %v153 = vsel %vm148, %v43, 0
    %v156 = vsel %vm148, %v44, 0
    %v159 = vsel %vm148, %v45, 0
    %161 = vmatpush.bf16.msra.mxu0 0
    %162 = vmatpush.bf16.msra.mxu0 0
    %163 = vmatpush.bf16.msra.mxu0 0
    %164 = vmatpush.bf16.msra.mxu0 0
    %165 = vmatpush.bf16.msra.mxu0 0
    %166 = vmatpush.bf16.msra.mxu0 0
    %167 = vmatpush.bf16.msra.mxu0 %v145
    %168 = vmatpush.bf16.msra.mxu0 %v144
    %169 = vmatmul.bf16.gmra.mxu0 %v150
    %v170 = vpop.f32.mrf.mxu0
    %v171 = vadd.f32 %v117, %v170
    %v172 = vpop.f32.mrf.mxu0
    %v173 = vadd.f32 %v119, %v172
    %174 = vmatmul.bf16.gmra.mxu0 %v153
    %v175 = vpop.f32.mrf.mxu0
    %v176 = vadd.f32 %v122, %v175
    %v177 = vpop.f32.mrf.mxu0
    %v178 = vadd.f32 %v124, %v177
    %179 = vmatmul.bf16.gmra.mxu0 %v156
    %v180 = vpop.f32.mrf.mxu0
    %v181 = vadd.f32 %v127, %v180
    %v182 = vpop.f32.mrf.mxu0
    %v183 = vadd.f32 %v129, %v182
    %184 = vmatmul.bf16.gmra.mxu0 %v159
    %v185 = vpop.f32.mrf.mxu0
    %v186 = vadd.f32 %v132, %v185
    %v187 = vpop.f32.mrf.mxu0
    %v188 = vadd.f32 %v134, %v187
    %189 = vdwg.mxu0
    %v190 = vld [vmem:[%s4] sm:$0x1]
    %v192 = vperm.slane %v190, 0
    %v194 = vadd.f32 %v171, %v192
    %v195 = vadd.f32 %v173, %v192
    %v196 = vadd.f32 %v176, %v192
    %v197 = vadd.f32 %v178, %v192
    %v198 = vadd.f32 %v181, %v192
    %v199 = vadd.f32 %v183, %v192
    %v200 = vadd.f32 %v186, %v192
    %v201 = vadd.f32 %v188, %v192
    %vm202 = vcmp.gt.f32.partialorder %v194, 0.0
    %vm203 = vcmp.gt.f32.partialorder %v195, 0.0
    %vm204 = vcmp.gt.f32.partialorder %v196, 0.0
    %vm205 = vcmp.gt.f32.partialorder %v197, 0.0
    %vm206 = vcmp.gt.f32.partialorder %v198, 0.0
    %vm207 = vcmp.gt.f32.partialorder %v199, 0.0
    %vm208 = vcmp.gt.f32.partialorder %v200, 0.0
    %vm209 = vcmp.gt.f32.partialorder %v201, 0.0
    %v210 = vmul.f32 %v194, 0.01
    %v211 = vmul.f32 %v195, 0.01
    %v212 = vmul.f32 %v196, 0.01
    %v213 = vmul.f32 %v197, 0.01
    %v214 = vmul.f32 %v198, 0.01
    %v215 = vmul.f32 %v199, 0.01
    %v216 = vmul.f32 %v200, 0.01
    %v217 = vmul.f32 %v201, 0.01
    %v218 = vsel %vm202, %v194, %v210
    %v219 = vsel %vm203, %v195, %v211
    %v220 = vsel %vm204, %v196, %v212
    %v221 = vsel %vm205, %v197, %v213
    %v222 = vsel %vm206, %v198, %v214
    %v223 = vsel %vm207, %v199, %v215
    %v224 = vsel %vm208, %v200, %v216
    %v225 = vsel %vm209, %v201, %v217
    %v226 = vpack.c.bf16 %v219, %v218
    %v227 = vpack.c.bf16 %v221, %v220
    %v228 = vpack.c.bf16 %v223, %v222
    %v229 = vpack.c.bf16 %v225, %v224
    %v230 = vld [vmem:[%s5] sm:$0xf]
    %v231 = vld [vmem:[%s5 + $0x4] sm:$0xf]
    %v232 = vld [vmem:[%s5 + $0x8] sm:$0xf]
    %v233 = vld [vmem:[%s5 + $0xc] sm:$0xf]
    %v234 = vld [vmem:[%s5 + $0x10] sm:$0xf]
    %v235 = vld [vmem:[%s5 + $0x14] sm:$0xf]
    %v236 = vld [vmem:[%s5 + $0x18] sm:$0xf]
    %v237 = vld [vmem:[%s5 + $0x1c] sm:$0xf]
    %v238 = vld [vmem:[%s5 + $0x20] sm:$0xf]
    %v239 = vld [vmem:[%s5 + $0x24] sm:$0xf]
    %v240 = vld [vmem:[%s5 + $0x28] sm:$0xf]
    %v241 = vld [vmem:[%s5 + $0x2c] sm:$0xf]
    %v242 = vld [vmem:[%s5 + $0x30] sm:$0xf]
    %v243 = vld [vmem:[%s5 + $0x34] sm:$0xf]
    %v244 = vld [vmem:[%s5 + $0x38] sm:$0xf]
    %v245 = vld [vmem:[%s5 + $0x3c] sm:$0xf]
    %v246 = vld [vmem:[%s6] sm:$0x1]
    %v248 = vperm.slane %v246, 0
    %v266 = vunpack.c.l.b16 %v230
    %v267 = vunpack.c.l.b16 %v231
    %v268 = vunpack.c.l.b16 %v232
    %v269 = vunpack.c.l.b16 %v233
    %v270 = vunpack.c.l.b16 %v234
    %v271 = vunpack.c.l.b16 %v235
    %v272 = vunpack.c.l.b16 %v236
    %v273 = vunpack.c.l.b16 %v237
    %v274 = vunpack.c.l.b16 %v238
    %v275 = vunpack.c.l.b16 %v239
    %v276 = vunpack.c.l.b16 %v240
    %v277 = vunpack.c.l.b16 %v241
    %v278 = vunpack.c.l.b16 %v242
    %v279 = vunpack.c.l.b16 %v243
    %v280 = vunpack.c.l.b16 %v244
    %v281 = vunpack.c.l.b16 %v245
    %v282 = vpack.c.b16 %v267, %v266
    %v283 = vpack.c.b16 %v269, %v268
    %v284 = vpack.c.b16 %v271, %v270
    %v285 = vpack.c.b16 %v273, %v272
    %v286 = vpack.c.b16 %v275, %v274
    %v287 = vpack.c.b16 %v277, %v276
    %v288 = vpack.c.b16 %v279, %v278
    %v289 = vpack.c.b16 %v281, %v280
    %298 = vmatpush.bf16.msra.mxu0 %v289
    %299 = vmatpush.bf16.msra.mxu0 %v288
    %300 = vmatpush.bf16.msra.mxu0 %v287
    %301 = vmatpush.bf16.msra.mxu0 %v286
    %302 = vmatpush.bf16.msra.mxu0 %v285
    %303 = vmatpush.bf16.msra.mxu0 %v284
    %304 = vmatpush.bf16.msra.mxu0 %v283
    %305 = vmatpush.bf16.msra.mxu0 %v282
    %306 = vmatmul.bf16.gmra.mxu0 %v226
    %v307 = vpop.f32.mrf.mxu0
    %v308 = vadd.f32 %v248, %v307
    %v309 = vpop.f32.mrf.mxu0
    %v310 = vadd.f32 %v248, %v309
    %311 = vmatmul.bf16.gmra.mxu0 %v227
    %v312 = vpop.f32.mrf.mxu0
    %v313 = vadd.f32 %v248, %v312
    %v314 = vpop.f32.mrf.mxu0
    %v315 = vadd.f32 %v248, %v314
    %316 = vmatmul.bf16.gmra.mxu0 %v228
    %v317 = vpop.f32.mrf.mxu0
    %v318 = vadd.f32 %v248, %v317
    %v319 = vpop.f32.mrf.mxu0
    %v320 = vadd.f32 %v248, %v319
    %321 = vmatmul.bf16.gmra.mxu0 %v229
    %v322 = vpop.f32.mrf.mxu0
    %v323 = vadd.f32 %v248, %v322
    %v324 = vpop.f32.mrf.mxu0
    %v325 = vadd.f32 %v248, %v324
    %326 = vdwg.mxu0
    %vm327 = vcmp.gt.f32.partialorder %v308, 0.0
    %vm328 = vcmp.gt.f32.partialorder %v310, 0.0
    %vm329 = vcmp.gt.f32.partialorder %v313, 0.0
    %vm330 = vcmp.gt.f32.partialorder %v315, 0.0
    %vm331 = vcmp.gt.f32.partialorder %v318, 0.0
    %vm332 = vcmp.gt.f32.partialorder %v320, 0.0
    %vm333 = vcmp.gt.f32.partialorder %v323, 0.0
    %vm334 = vcmp.gt.f32.partialorder %v325, 0.0
    %v335 = vmul.f32 %v308, 0.01
    %v336 = vmul.f32 %v310, 0.01
    %v337 = vmul.f32 %v313, 0.01
    %v338 = vmul.f32 %v315, 0.01
    %v339 = vmul.f32 %v318, 0.01
    %v340 = vmul.f32 %v320, 0.01
    %v341 = vmul.f32 %v323, 0.01
    %v342 = vmul.f32 %v325, 0.01
    %v343 = vsel %vm327, %v308, %v335
    %v344 = vsel %vm328, %v310, %v336
    %v345 = vsel %vm329, %v313, %v337
    %v346 = vsel %vm330, %v315, %v338
    %v347 = vsel %vm331, %v318, %v339
    %v348 = vsel %vm332, %v320, %v340
    %v349 = vsel %vm333, %v323, %v341
    %v350 = vsel %vm334, %v325, %v342
    %v351 = vpack.c.bf16 %v344, %v343
    %v352 = vpack.c.bf16 %v346, %v345
    %v353 = vpack.c.bf16 %v348, %v347
    %v354 = vpack.c.bf16 %v350, %v349
    %v355 = vld [vmem:[%s7] sm:$0xff]
    %v356 = vld [vmem:[%s7 + $0x8] sm:$0xff]
    %v357 = vld [vmem:[%s7 + $0x10] sm:$0xff]
    %v358 = vld [vmem:[%s7 + $0x18] sm:$0xff]
    %v359 = vld [vmem:[%s7 + $0x20] sm:$0xff]
    %v360 = vld [vmem:[%s7 + $0x28] sm:$0xff]
    %v361 = vld [vmem:[%s7 + $0x30] sm:$0xff]
    %v362 = vld [vmem:[%s7 + $0x38] sm:$0xff]
    %v363 = vld [vmem:[%s7 + $0x40] sm:$0xff]
    %v364 = vld [vmem:[%s7 + $0x48] sm:$0xff]
    %v365 = vld [vmem:[%s7 + $0x50] sm:$0xff]
    %v366 = vld [vmem:[%s7 + $0x58] sm:$0xff]
    %v367 = vld [vmem:[%s7 + $0x60] sm:$0xff]
    %v368 = vld [vmem:[%s7 + $0x68] sm:$0xff]
    %v369 = vld [vmem:[%s7 + $0x70] sm:$0xff]
    %v370 = vld [vmem:[%s7 + $0x78] sm:$0xff]
    %v371 = vld [vmem:[%s8] sm:$0x3]
    %v373 = vperm.slane %v371, 0
    %v374 = vperm.slane %v371, 1
    %v393 = vunpack.c.l.b16 %v355
    %v394 = vunpack.c.h.b16 %v355
    %v395 = vunpack.c.l.b16 %v356
    %v396 = vunpack.c.h.b16 %v356
    %v397 = vunpack.c.l.b16 %v357
    %v398 = vunpack.c.h.b16 %v357
    %v399 = vunpack.c.l.b16 %v358
    %v400 = vunpack.c.h.b16 %v358
    %v401 = vunpack.c.l.b16 %v359
    %v402 = vunpack.c.h.b16 %v359
    %v403 = vunpack.c.l.b16 %v360
    %v404 = vunpack.c.h.b16 %v360
    %v405 = vunpack.c.l.b16 %v361
    %v406 = vunpack.c.h.b16 %v361
    %v407 = vunpack.c.l.b16 %v362
    %v408 = vunpack.c.h.b16 %v362
    %v409 = vunpack.c.l.b16 %v363
    %v410 = vunpack.c.h.b16 %v363
    %v411 = vunpack.c.l.b16 %v364
    %v412 = vunpack.c.h.b16 %v364
    %v413 = vunpack.c.l.b16 %v365
    %v414 = vunpack.c.h.b16 %v365
    %v415 = vunpack.c.l.b16 %v366
    %v416 = vunpack.c.h.b16 %v366
    %v417 = vunpack.c.l.b16 %v367
    %v418 = vunpack.c.h.b16 %v367
    %v419 = vunpack.c.l.b16 %v368
    %v420 = vunpack.c.h.b16 %v368
    %v421 = vunpack.c.l.b16 %v369
    %v422 = vunpack.c.h.b16 %v369
    %v423 = vunpack.c.l.b16 %v370
    %v424 = vunpack.c.h.b16 %v370
    %v425 = vpack.c.b16 %v395, %v393
    %v426 = vpack.c.b16 %v396, %v394
    %v427 = vpack.c.b16 %v399, %v397
    %v428 = vpack.c.b16 %v400, %v398
    %v429 = vpack.c.b16 %v403, %v401
    %v430 = vpack.c.b16 %v404, %v402
    %v431 = vpack.c.b16 %v407, %v405
    %v432 = vpack.c.b16 %v408, %v406
    %v433 = vpack.c.b16 %v411, %v409
    %v434 = vpack.c.b16 %v412, %v410
    %v435 = vpack.c.b16 %v415, %v413
    %v436 = vpack.c.b16 %v416, %v414
    %v437 = vpack.c.b16 %v419, %v417
    %v438 = vpack.c.b16 %v420, %v418
    %v439 = vpack.c.b16 %v423, %v421
    %v440 = vpack.c.b16 %v424, %v422
    %457 = vmatpush.bf16.msra.mxu0 %v439
    %458 = vmatpush.bf16.msra.mxu0 %v437
    %459 = vmatpush.bf16.msra.mxu0 %v435
    %460 = vmatpush.bf16.msra.mxu0 %v433
    %461 = vmatpush.bf16.msra.mxu0 %v431
    %462 = vmatpush.bf16.msra.mxu0 %v429
    %463 = vmatpush.bf16.msra.mxu0 %v427
    %464 = vmatpush.bf16.msra.mxu0 %v425
    %465 = vmatmul.bf16.gmra.mxu0 %v351
    %v466 = vpop.f32.mrf.mxu0
    %v467 = vadd.f32 %v373, %v466
    %v468 = vpop.f32.mrf.mxu0
    %v469 = vadd.f32 %v373, %v468
    %470 = vmatmul.bf16.gmra.mxu0 %v352
    %v471 = vpop.f32.mrf.mxu0
    %v472 = vadd.f32 %v373, %v471
    %v473 = vpop.f32.mrf.mxu0
    %v474 = vadd.f32 %v373, %v473
    %475 = vmatmul.bf16.gmra.mxu0 %v353
    %v476 = vpop.f32.mrf.mxu0
    %v477 = vadd.f32 %v373, %v476
    %v478 = vpop.f32.mrf.mxu0
    %v479 = vadd.f32 %v373, %v478
    %480 = vmatmul.bf16.gmra.mxu0 %v354
    %v481 = vpop.f32.mrf.mxu0
    %v482 = vadd.f32 %v373, %v481
    %v483 = vpop.f32.mrf.mxu0
    %v484 = vadd.f32 %v373, %v483
    %485 = vdwg.mxu0
    %486 = vmatpush.bf16.msra.mxu0 %v440
    %487 = vmatpush.bf16.msra.mxu0 %v438
    %488 = vmatpush.bf16.msra.mxu0 %v436
    %489 = vmatpush.bf16.msra.mxu0 %v434
    %490 = vmatpush.bf16.msra.mxu0 %v432
    %491 = vmatpush.bf16.msra.mxu0 %v430
    %492 = vmatpush.bf16.msra.mxu0 %v428
    %493 = vmatpush.bf16.msra.mxu0 %v426
    %494 = vmatmul.bf16.gmra.mxu0 %v351
    %v495 = vpop.f32.mrf.mxu0
    %v496 = vadd.f32 %v374, %v495
    %v497 = vpop.f32.mrf.mxu0
    %v498 = vadd.f32 %v374, %v497
    %499 = vmatmul.bf16.gmra.mxu0 %v352
    %v500 = vpop.f32.mrf.mxu0
    %v501 = vadd.f32 %v374, %v500
    %v502 = vpop.f32.mrf.mxu0
    %v503 = vadd.f32 %v374, %v502
    %504 = vmatmul.bf16.gmra.mxu0 %v353
    %v505 = vpop.f32.mrf.mxu0
    %v506 = vadd.f32 %v374, %v505
    %v507 = vpop.f32.mrf.mxu0
    %v508 = vadd.f32 %v374, %v507
    %509 = vmatmul.bf16.gmra.mxu0 %v354
    %v510 = vpop.f32.mrf.mxu0
    %v511 = vadd.f32 %v374, %v510
    %v512 = vpop.f32.mrf.mxu0
    %v513 = vadd.f32 %v374, %v512
    %514 = vdwg.mxu0
    %515 = vst [vmem:[#allocation2] sm:$0xff] %v467
    %vm516 = vcmask 424960
    %517 = vst.msk [vmem:[#allocation2 + $0x8] sm:$0xff] %vm516, %v496
    %518 = vst [vmem:[#allocation2 + $0x10] sm:$0xff] %v469
    %519 = vst.msk [vmem:[#allocation2 + $0x18] sm:$0xff] %vm516, %v498
    %520 = vst [vmem:[#allocation2 + $0x20] sm:$0xff] %v472
    %521 = vst.msk [vmem:[#allocation2 + $0x28] sm:$0xff] %vm516, %v501
    %522 = vst [vmem:[#allocation2 + $0x30] sm:$0xff] %v474
    %523 = vst.msk [vmem:[#allocation2 + $0x38] sm:$0xff] %vm516, %v503
    %524 = vst [vmem:[#allocation2 + $0x40] sm:$0xff] %v477
    %525 = vst.msk [vmem:[#allocation2 + $0x48] sm:$0xff] %vm516, %v506
    %526 = vst [vmem:[#allocation2 + $0x50] sm:$0xff] %v479
    %527 = vst.msk [vmem:[#allocation2 + $0x58] sm:$0xff] %vm516, %v508
    %528 = vst [vmem:[#allocation2 + $0x60] sm:$0xff] %v482
    %529 = vst.msk [vmem:[#allocation2 + $0x68] sm:$0xff] %vm516, %v511
    %530 = vst [vmem:[#allocation2 + $0x70] sm:$0xff] %v484
    %531 = vst.msk [vmem:[#allocation2 + $0x78] sm:$0xff] %vm516, %v513
    // Predicated region
    $region38: #{tpu_custom_call.1} parent=1 // pred_check
      _
    $region39: #{tpu_custom_call.1} parent=1 // pred_check_branch
      %533 = sbr.rel (0) target = $region41
    $region40: #{tpu_custom_call.1} parent=1 // pred_region
      %535 = vsyncadd [#allocation3], 0
      %s536 = sshll.u32 [#allocation2], 4
      %s537 = int_to_ptr.vmem [resolvable:$true] %s536
      %s538 = sshll.u32 %s9, 4
      %s539 = int_to_ptr.hbm [resolvable:$true] %s538
      %544 = dma.vmem_to_hbm [thread:$0]  %s537, 2048, %s539, [#allocation3], 256, 256, 16
    $region41: #{tpu_custom_call.1} parent=1 // pred_fallthru
      _
    // Predicated region
    $region42: #{tpu_custom_call.1} parent=1 // pred_check
      _
    $region43: #{tpu_custom_call.1} parent=1 // pred_check_branch
      %546 = sbr.rel (0) target = $region45
    $region44: #{tpu_custom_call.1} parent=1 // pred_region
      %548 = dma.done [#allocation3], 2048
    $region45: #{tpu_custom_call.1} parent=1 // pred_fallthru
      _
    %549 = vsyncpa [#allocation3], 1

</llo_original>
